<compile_context>
chip_gen: v6e
topology: v6e:2x2x1
jax: 0.10.0
libtpu: 0.0.40
codegen_flags: <defaults>
</compile_context>

<pallas_src>
import functools

import jax
import jax.numpy as jnp
from jax.experimental import pallas as pl
from jax.experimental.pallas import tpu as pltpu

_LANE = 128
_SUBLANE = 8


def _round_up(x, m):
    return ((x + m - 1) // m) * m


def _mlp_kernel(x_ref, w1_ref, b1_ref, w2_ref, b2_ref, o_ref):
    # (bm, K) @ (K, Hp) -> hidden, bias + ReLU, then (bm, Hp) @ (Hp, Op) + bias.
    h = jnp.dot(
        x_ref[...], w1_ref[...],
        preferred_element_type=jnp.float32,
        precision=jax.lax.Precision.HIGHEST,
    )
    h = jnp.maximum(h + b1_ref[...], 0.0)                       # Linear1 + ReLU
    y = jnp.dot(
        h.astype(w2_ref.dtype), w2_ref[...],
        preferred_element_type=jnp.float32,
        precision=jax.lax.Precision.HIGHEST,
    )
    o_ref[...] = (y + b2_ref[...]).astype(o_ref.dtype)          # Linear2


def prepare_params(params, dtype=jnp.float32):
    """One-time padding of weights/biases to TPU-aligned shapes.

    Hoisted out of the hot path: hidden/out dims are zero-padded to multiples
    of 128 lanes (mathematically inert), the contraction dim of w1 keeps the
    native in_features so x never needs K padding.  Pass dtype=jnp.bfloat16
    for the faster (non-bit-exact) operand path.
    """
    w1, b1, w2, b2 = params["w1"], params["b1"], params["w2"], params["b2"]
    in_features, hidden = w1.shape
    out_classes = w2.shape[1]
    Hp = _round_up(hidden, _LANE)
    Op = _round_up(out_classes, _LANE)
    w1p = jnp.zeros((in_features, Hp), dtype).at[:, :hidden].set(w1.astype(dtype))
    b1p = jnp.zeros((1, Hp), jnp.float32).at[0, :hidden].set(b1.astype(jnp.float32))
    w2p = jnp.zeros((Hp, Op), dtype).at[:hidden, :out_classes].set(w2.astype(dtype))
    b2p = jnp.zeros((1, Op), jnp.float32).at[0, :out_classes].set(b2.astype(jnp.float32))
    return {"w1": w1p, "b1": b1p, "w2": w2p, "b2": b2p}


@functools.partial(jax.jit, static_argnames=("out_classes",))
def attack_mlp_forward(x, padded_params, out_classes):
    """x: (batch, input_size) f32. padded_params: from prepare_params.
    Returns (batch, out_classes) f32."""
    w1p = padded_params["w1"]
    b1p = padded_params["b1"]
    w2p = padded_params["w2"]
    b2p = padded_params["b2"]

    batch, in_features = x.shape
    assert w1p.shape[0] == in_features, (w1p.shape, in_features)
    Hp = w1p.shape[1]
    Op = w2p.shape[1]
    compute_dtype = w1p.dtype

    # Batch tiling: pad rows to a multiple of the tile so the grid exactly
    # covers the batch (no pl truncation).  For >8 rows target >=2 grid steps
    # so v7x megacore can shard the parallel axis; cap tiles at 512 rows.
    Bp = _round_up(max(batch, 1), _SUBLANE)
    if Bp <= _SUBLANE:
        bm = Bp
    else:
        bm = min(512, _round_up(pl.cdiv(Bp, 2), _SUBLANE))
    grid_m = pl.cdiv(Bp, bm)
    Bp = grid_m * bm

    xp = jnp.zeros((Bp, in_features), compute_dtype)
    xp = xp.at[:batch, :].set(x.astype(compute_dtype))

    out_padded = pl.pallas_call(
        _mlp_kernel,
        out_shape=jax.ShapeDtypeStruct((Bp, Op), jnp.float32),
        grid=(grid_m,),
        in_specs=[
            # x: last dim equals the full array dim -> no 128 padding needed.
            pl.BlockSpec((bm, in_features), lambda i: (i, 0)),
            # Weights/biases: constant index_map, DMA'd once, broadcast to all steps.
            pl.BlockSpec((in_features, Hp), lambda i: (0, 0)),
            pl.BlockSpec((1, Hp), lambda i: (0, 0)),
            pl.BlockSpec((Hp, Op), lambda i: (0, 0)),
            pl.BlockSpec((1, Op), lambda i: (0, 0)),
        ],
        out_specs=pl.BlockSpec((bm, Op), lambda i: (i, 0)),
        compiler_params=pltpu.CompilerParams(
            dimension_semantics=("parallel",),
        ),
    )(xp, w1p, b1p, w2p, b2p)

    return out_padded[:batch, :out_classes]


def init_params(key, input_size, hidden_size=64, out_classes=2):
    """Deterministic synthetic parameters matching AttackMLP's shapes."""
    k1, k2, k3, k4 = jax.random.split(key, 4)
    return {
        "w1": jax.random.normal(k1, (input_size, hidden_size), jnp.float32)
              * jnp.sqrt(1.0 / input_size),
        "b1": 0.01 * jax.random.normal(k2, (hidden_size,), jnp.float32),
        "w2": jax.random.normal(k3, (hidden_size, out_classes), jnp.float32)
              * jnp.sqrt(1.0 / hidden_size),
        "b2": 0.01 * jax.random.normal(k4, (out_classes,), jnp.float32),
    }


def attack_mlp_reference(x, params):
    """Pure-JAX reference of the PyTorch forward (for correctness check)."""
    h = jnp.maximum(x @ params["w1"] + params["b1"], 0.0)
    return h @ params["w2"] + params["b2"]


if __name__ == "__main__":
    key = jax.random.PRNGKey(0)
    kx, kp = jax.random.split(key)

    batch, input_size, hidden_size, out_classes = 2, 32, 64, 2
    x = jax.random.normal(kx, (batch, input_size), jnp.float32)
    params = init_params(kp, input_size, hidden_size, out_classes)

    # One-time parameter preparation (outside the per-call hot path).
    padded = prepare_params(params)
    padded = jax.tree_util.tree_map(jax.block_until_ready, padded)

    out = attack_mlp_forward(x, padded, out_classes)
    out = jax.block_until_ready(out)

    assert out.shape == (batch, out_classes), out.shape
    assert bool(jnp.all(jnp.isfinite(out)))

    ref = attack_mlp_reference(x, params)
    assert bool(jnp.allclose(out, ref, atol=1e-5, rtol=1e-5)), (out, ref)

    print("KERNEL_OK")
</pallas_src>

<mosaic_0001>
module attributes {stable_mosaic.version = 11 : i64} {
  func.func @_mlp_kernel(%arg0: i32, %arg1: memref<8x32xf32, #tpu.memory_space<vmem>>, %arg2: memref<32x128xf32, #tpu.memory_space<vmem>>, %arg3: memref<1x128xf32, #tpu.memory_space<vmem>>, %arg4: memref<128x128xf32, #tpu.memory_space<vmem>>, %arg5: memref<1x128xf32, #tpu.memory_space<vmem>>, %arg6: memref<8x128xf32, #tpu.memory_space<vmem>>) attributes {dimension_semantics = [#tpu.dimension_semantics<parallel>], iteration_bounds = array<i64: 1>, scalar_prefetch = 0 : i64, scratch_operands = 0 : i64, tpu.core_type = #tpu.core_type<tc>, window_params = [{transform_indices = @transform_0, window_bounds = array<i64: 8, 32>}, {pipeline_mode = #tpu.pipeline_mode<synchronous>, transform_indices = @transform_1, window_bounds = array<i64: 32, 128>}, {pipeline_mode = #tpu.pipeline_mode<synchronous>, transform_indices = @transform_2, window_bounds = array<i64: 1, 128>}, {pipeline_mode = #tpu.pipeline_mode<synchronous>, transform_indices = @transform_3, window_bounds = array<i64: 128, 128>}, {pipeline_mode = #tpu.pipeline_mode<synchronous>, transform_indices = @transform_4, window_bounds = array<i64: 1, 128>}, {transform_indices = @transform_5, window_bounds = array<i64: 8, 128>}]} {
    %c0 = arith.constant 0 : index
    %c0_0 = arith.constant 0 : index
    %0 = vector.load %arg1[%c0, %c0_0] : memref<8x32xf32, #tpu.memory_space<vmem>>, vector<8x32xf32>
    %c0_1 = arith.constant 0 : index
    %c0_2 = arith.constant 0 : index
    %1 = vector.load %arg2[%c0_1, %c0_2] : memref<32x128xf32, #tpu.memory_space<vmem>>, vector<32x128xf32>
    %cst = arith.constant dense<0.000000e+00> : vector<8x128xf32>
    %2 = tpu.matmul %0, %1, %cst {dimension_numbers = #tpu.dot_dimension_numbers<[1], [0], [0], [1], [0, 0, 1, 1], [], []>, precision = #tpu.contract_precision<fp32>} : vector<8x32xf32>, vector<32x128xf32>, vector<8x128xf32> -> vector<8x128xf32>
    %c0_3 = arith.constant 0 : index
    %c0_4 = arith.constant 0 : index
    %3 = vector.load %arg3[%c0_3, %c0_4] : memref<1x128xf32, #tpu.memory_space<vmem>>, vector<1x128xf32>
    %4 = vector.broadcast %3 : vector<1x128xf32> to vector<8x128xf32>
    %5 = arith.addf %2, %4 : vector<8x128xf32>
    %cst_5 = arith.constant 0.000000e+00 : f32
    %6 = vector.broadcast %cst_5 : f32 to vector<8x128xf32>
    %7 = arith.maximumf %5, %6 : vector<8x128xf32>
    %c0_6 = arith.constant 0 : index
    %c0_7 = arith.constant 0 : index
    %8 = vector.load %arg4[%c0_6, %c0_7] : memref<128x128xf32, #tpu.memory_space<vmem>>, vector<128x128xf32>
    %cst_8 = arith.constant dense<0.000000e+00> : vector<8x128xf32>
    %9 = tpu.matmul %7, %8, %cst_8 {dimension_numbers = #tpu.dot_dimension_numbers<[1], [0], [0], [1], [0, 0, 1, 1], [], []>, precision = #tpu.contract_precision<fp32>} : vector<8x128xf32>, vector<128x128xf32>, vector<8x128xf32> -> vector<8x128xf32>
    %c0_9 = arith.constant 0 : index
    %c0_10 = arith.constant 0 : index
    %10 = vector.load %arg5[%c0_9, %c0_10] : memref<1x128xf32, #tpu.memory_space<vmem>>, vector<1x128xf32>
    %11 = vector.broadcast %10 : vector<1x128xf32> to vector<8x128xf32>
    %12 = arith.addf %9, %11 : vector<8x128xf32>
    %c0_11 = arith.constant 0 : index
    %c0_12 = arith.constant 0 : index
    %13 = vector.load %arg6[%c0_11, %c0_12] : memref<8x128xf32, #tpu.memory_space<vmem>>, vector<8x128xf32>
    tpu.vector_store %arg6[%c0_11, %c0_12], %12 {strides = array<i32>} : memref<8x128xf32, #tpu.memory_space<vmem>>, vector<8x128xf32>,
    return
  }
  func.func @transform_0(%arg0: i32) -> (i32, i32) {
    %c0_i32 = arith.constant 0 : i32
    %c0_i32_0 = arith.constant 0 : i32
    return %arg0, %c0_i32 : i32, i32
  }
  func.func @transform_1(%arg0: i32) -> (i32, i32) {
    %c0_i32 = arith.constant 0 : i32
    %c0_i32_0 = arith.constant 0 : i32
    %c0_i32_1 = arith.constant 0 : i32
    return %c0_i32, %c0_i32_0 : i32, i32
  }
  func.func @transform_2(%arg0: i32) -> (i32, i32) {
    %c0_i32 = arith.constant 0 : i32
    %c0_i32_0 = arith.constant 0 : i32
    %c0_i32_1 = arith.constant 0 : i32
    return %c0_i32, %c0_i32_0 : i32, i32
  }
  func.func @transform_3(%arg0: i32) -> (i32, i32) {
    %c0_i32 = arith.constant 0 : i32
    %c0_i32_0 = arith.constant 0 : i32
    %c0_i32_1 = arith.constant 0 : i32
    return %c0_i32, %c0_i32_0 : i32, i32
  }
  func.func @transform_4(%arg0: i32) -> (i32, i32) {
    %c0_i32 = arith.constant 0 : i32
    %c0_i32_0 = arith.constant 0 : i32
    %c0_i32_1 = arith.constant 0 : i32
    return %c0_i32, %c0_i32_0 : i32, i32
  }
  func.func @transform_5(%arg0: i32) -> (i32, i32) {
    %c0_i32 = arith.constant 0 : i32
    %c0_i32_0 = arith.constant 0 : i32
    return %arg0, %c0_i32 : i32, i32
  }
}

</mosaic_0001>

<llo_original>
// kernel: attack_mlp_forward.1
$region0: #{attack_mlp_forward.1}
  #allocation0 [shape = 'u32[]', space=smem, size = 0x4, offset = 0x4, fixed_abs, tag = 'smem constant byte address 0x4 - core index']
  #allocation1 [shape = 'u32[144,128]{1,0:T(1,128)}', space=vmem, size = 0x12000, scoped, tag = 'internal scratch']
  %s0 = inlined_call_operand.vmem [shape: f32[8,32], index: 0, kind: input, shape index: {}]
  %s1 = inlined_call_operand.hbm [shape: f32[32,128], index: 1, kind: input, shape index: {}]
  %s2 = inlined_call_operand.vmem [shape: f32[1,128], index: 2, kind: input, shape index: {}]
  %s3 = inlined_call_operand.hbm [shape: f32[128,128], index: 3, kind: input, shape index: {}]
  %s4 = inlined_call_operand.vmem [shape: f32[1,128], index: 4, kind: input, shape index: {}]
  %s5 = inlined_call_operand.vmem [shape: f32[8,128], index: 5, kind: output, shape index: {}]
  %s6 = sld [smem:[#allocation0]]
  $region38: #{attack_mlp_forward.1} parent=0
    _
  %s8 = ssub.s32 1, %s6
  %s9 = scalar_select 0, %s8, %s6
  $region1: #{attack_mlp_forward.1} parent=0
    #allocation2 [shape = 'u8[16384]{0}', space=vmem, size = 0x4000, scoped, tag = 'input window, operand 1, single buffered']
    #allocation3 [shape = 's32[1]{0}', space=sflag, size = 0x4, scoped, tag = 'scoped memory for attack_mlp_forward.1']
    #allocation4 [shape = 'u8[65536]{0}', space=vmem, size = 0x10000, scoped, tag = 'input window, operand 3, single buffered']
    #allocation5 [shape = 's32[1]{0}', space=sflag, size = 0x4, scoped, tag = 'scoped memory for attack_mlp_forward.1']
    %10 = vsyncpa [#allocation3], 0
    %11 = vsyncpa [#allocation5], 0
    // Predicated region
    $region2: #{attack_mlp_forward.1} parent=1 // pred_check
      _
    $region3: #{attack_mlp_forward.1} parent=1 // pred_check_branch
      %13 = sbr.rel (0) target = $region5
    $region4: #{attack_mlp_forward.1} parent=1 // pred_region
      _
    $region5: #{attack_mlp_forward.1} parent=1 // pred_fallthru
      _
    // Predicated region
    $region6: #{attack_mlp_forward.1} parent=1 // pred_check
      _
    $region7: #{attack_mlp_forward.1} parent=1 // pred_check_branch
      %15 = sbr.rel (0) target = $region9
    $region8: #{attack_mlp_forward.1} parent=1 // pred_region
      %s17 = ssub.s32 512, 512
      %18 = vsyncadd [#allocation3], %s17
      %s19 = sshll.u32 [#allocation2], 4
      %s20 = int_to_ptr.vmem [resolvable:$true] %s19
      %25 = dma.hbm_to_vmem [thread:$0]  %s1, 512, %s20, [#allocation3], 128, 128, 8
    $region9: #{attack_mlp_forward.1} parent=1 // pred_fallthru
      _
    // Predicated region
    $region10: #{attack_mlp_forward.1} parent=1 // pred_check
      _
    $region11: #{attack_mlp_forward.1} parent=1 // pred_check_branch
      %27 = sbr.rel (0) target = $region13
    $region12: #{attack_mlp_forward.1} parent=1 // pred_region
      _
    $region13: #{attack_mlp_forward.1} parent=1 // pred_fallthru
      _
    // Predicated region
    $region14: #{attack_mlp_forward.1} parent=1 // pred_check
      _
    $region15: #{attack_mlp_forward.1} parent=1 // pred_check_branch
      %29 = sbr.rel (0) target = $region17
    $region16: #{attack_mlp_forward.1} parent=1 // pred_region
      %s31 = ssub.s32 2048, 2048
      %32 = vsyncadd [#allocation5], %s31
      %s33 = sshll.u32 [#allocation4], 4
      %s34 = int_to_ptr.vmem [resolvable:$true] %s33
      %39 = dma.hbm_to_vmem [thread:$0]  %s3, 2048, %s34, [#allocation5], 128, 128, 8
    $region17: #{attack_mlp_forward.1} parent=1 // pred_fallthru
      _
    // Predicated region
    $region18: #{attack_mlp_forward.1} parent=1 // pred_check
      _
    $region19: #{attack_mlp_forward.1} parent=1 // pred_check_branch
      %41 = sbr.rel (0) target = $region21
    $region20: #{attack_mlp_forward.1} parent=1 // pred_region
      _
    $region21: #{attack_mlp_forward.1} parent=1 // pred_fallthru
      _
    // Predicated region
    $region22: #{attack_mlp_forward.1} parent=1 // pred_check
      _
    $region23: #{attack_mlp_forward.1} parent=1 // pred_check_branch
      %43 = sbr.rel (0) target = $region25
    $region24: #{attack_mlp_forward.1} parent=1 // pred_region
      %44 = dma.done [#allocation3], 512
    $region25: #{attack_mlp_forward.1} parent=1 // pred_fallthru
      _
    // Predicated region
    $region26: #{attack_mlp_forward.1} parent=1 // pred_check
      _
    $region27: #{attack_mlp_forward.1} parent=1 // pred_check_branch
      %46 = sbr.rel (0) target = $region29
    $region28: #{attack_mlp_forward.1} parent=1 // pred_region
      %47 = dma.done [#allocation5], 2048
    $region29: #{attack_mlp_forward.1} parent=1 // pred_fallthru
      _
    %v48 = vld [vmem:[%s0] sm:$0xff]
    %v49 = vld [vmem:[#allocation2] sm:$0xff]
    %v50 = vld [vmem:[#allocation2 + $0x8] sm:$0xff]
    %v51 = vld [vmem:[#allocation2 + $0x10] sm:$0xff]
    %v52 = vld [vmem:[#allocation2 + $0x18] sm:$0xff]
    %v53 = vld [vmem:[%s2] sm:$0x1]
    %v55 = vlaneseq
    %v56 = vshrl.u32 %v55, 7
    %v57 = vsub.s32 0, %v56
    %v58 = vrot.slane %v53, %v57
    %vm60 = vcmask 261120
    %v62 = vsel %vm60, %v48, 0
    %64 = vmatprep.subr.mxu0 0.0
    %65 = vmatpush1.msra.mxu0 0.0
    %66 = vmatprep.subr.mxu0 0.0
    %67 = vmatpush1.msra.mxu0 0.0
    %68 = vmatprep.subr.mxu0 0.0
    %69 = vmatpush1.msra.mxu0 0.0
    %70 = vmatprep.subr.mxu0 0.0
    %71 = vmatpush1.msra.mxu0 0.0
    %72 = vmatprep.subr.mxu0 0.0
    %73 = vmatpush1.msra.mxu0 0.0
    %74 = vmatprep.subr.mxu0 0.0
    %75 = vmatpush1.msra.mxu0 0.0
    %76 = vmatprep.subr.mxu0 0.0
    %77 = vmatpush1.msra.mxu0 0.0
    %78 = vmatprep.subr.mxu0 0.0
    %79 = vmatpush1.msra.mxu0 0.0
    %80 = vmatprep.subr.mxu0 0.0
    %81 = vmatpush1.msra.mxu0 0.0
    %82 = vmatprep.subr.mxu0 0.0
    %83 = vmatpush1.msra.mxu0 0.0
    %84 = vmatprep.subr.mxu0 0.0
    %85 = vmatpush1.msra.mxu0 0.0
    %86 = vmatprep.subr.mxu0 0.0
    %87 = vmatpush1.msra.mxu0 0.0
    %88 = vmatprep.subr.mxu0 0.0
    %v89 = vand.u32 %v52, 4294901760
    %90 = vmatpush1.msra.mxu0 %v89
    %91 = vmatprep.subr.mxu0 0.0
    %v92 = vand.u32 %v51, 4294901760
    %93 = vmatpush1.msra.mxu0 %v92
    %94 = vmatprep.subr.mxu0 0.0
    %v95 = vand.u32 %v50, 4294901760
    %96 = vmatpush1.msra.mxu0 %v95
    %97 = vmatprep.subr.mxu0 0.0
    %v98 = vand.u32 %v49, 4294901760
    %99 = vmatpush1.msra.mxu0 %v98
    %100 = vmatprep.subr.mxu0 0.0
    %101 = vmatpush2.msra.mxu0 0.0
    %102 = vmatprep.subr.mxu0 0.0
    %103 = vmatpush2.msra.mxu0 0.0
    %104 = vmatprep.subr.mxu0 0.0
    %105 = vmatpush2.msra.mxu0 0.0
    %106 = vmatprep.subr.mxu0 0.0
    %107 = vmatpush2.msra.mxu0 0.0
    %108 = vmatprep.subr.mxu0 0.0
    %109 = vmatpush2.msra.mxu0 0.0
    %110 = vmatprep.subr.mxu0 0.0
    %111 = vmatpush2.msra.mxu0 0.0
    %112 = vmatprep.subr.mxu0 0.0
    %113 = vmatpush2.msra.mxu0 0.0
    %114 = vmatprep.subr.mxu0 0.0
    %115 = vmatpush2.msra.mxu0 0.0
    %116 = vmatprep.subr.mxu0 0.0
    %117 = vmatpush2.msra.mxu0 0.0
    %118 = vmatprep.subr.mxu0 0.0
    %119 = vmatpush2.msra.mxu0 0.0
    %120 = vmatprep.subr.mxu0 0.0
    %121 = vmatpush2.msra.mxu0 0.0
    %122 = vmatprep.subr.mxu0 0.0
    %123 = vmatpush2.msra.mxu0 0.0
    %124 = vmatprep.subr.mxu0 0.0
    %125 = vmatpush2.msra.mxu0 0.0
    %126 = vmatprep.subr.mxu0 0.0
    %127 = vmatpush2.msra.mxu0 0.0
    %128 = vmatprep.subr.mxu0 0.0
    %129 = vmatpush2.msra.mxu0 0.0
    %130 = vmatprep.subr.mxu0 0.0
    %131 = vmatpush2.msra.mxu0 0.0
    %132 = vmatprep.mubr.f32.mxu0 0.0
    %v133 = vand.u32 %v62, 4294901760
    %v134 = vsub.f32 %v62, %v133
    %v135 = vand.u32 %v134, 4294901760
    %v136 = vsub.f32 %v134, %v135
    %v137 = vand.u32 %v136, 4294901760
    %138 = vmatmul.mubr.f32.gmra.mxu0 %v137
    %v139 = vpop.f32.mrf.mxu0
    %v140 = vadd.f32 %v58, %v139
    %v141 = vpop.f32.mrf.mxu0
    %142 = vdwg.mxu0
    %143 = vmatprep.subr.mxu0 0.0
    %144 = vmatpush1.msra.mxu0 0.0
    %145 = vmatprep.subr.mxu0 0.0
    %146 = vmatpush1.msra.mxu0 0.0
    %147 = vmatprep.subr.mxu0 0.0
    %148 = vmatpush1.msra.mxu0 0.0
    %149 = vmatprep.subr.mxu0 0.0
    %150 = vmatpush1.msra.mxu0 0.0
    %151 = vmatprep.subr.mxu0 0.0
    %152 = vmatpush1.msra.mxu0 0.0
    %153 = vmatprep.subr.mxu0 0.0
    %154 = vmatpush1.msra.mxu0 0.0
    %155 = vmatprep.subr.mxu0 0.0
    %156 = vmatpush1.msra.mxu0 0.0
    %157 = vmatprep.subr.mxu0 0.0
    %158 = vmatpush1.msra.mxu0 0.0
    %159 = vmatprep.subr.mxu0 0.0
    %160 = vmatpush1.msra.mxu0 0.0
    %161 = vmatprep.subr.mxu0 0.0
    %162 = vmatpush1.msra.mxu0 0.0
    %163 = vmatprep.subr.mxu0 0.0
    %164 = vmatpush1.msra.mxu0 0.0
    %165 = vmatprep.subr.mxu0 0.0
    %166 = vmatpush1.msra.mxu0 0.0
    %167 = vmatprep.subr.mxu0 0.0
    %v168 = vand.u32 %v52, 4294901760
    %v169 = vsub.f32 %v52, %v168
    %v170 = vand.u32 %v169, 4294901760
    %v171 = vsub.f32 %v169, %v170
    %v172 = vand.u32 %v171, 4294901760
    %173 = vmatpush1.msra.mxu0 %v172
    %174 = vmatprep.subr.mxu0 0.0
    %v175 = vand.u32 %v51, 4294901760
    %v176 = vsub.f32 %v51, %v175
    %v177 = vand.u32 %v176, 4294901760
    %v178 = vsub.f32 %v176, %v177
    %v179 = vand.u32 %v178, 4294901760
    %180 = vmatpush1.msra.mxu0 %v179
    %181 = vmatprep.subr.mxu0 0.0
    %v182 = vand.u32 %v50, 4294901760
    %v183 = vsub.f32 %v50, %v182
    %v184 = vand.u32 %v183, 4294901760
    %v185 = vsub.f32 %v183, %v184
    %v186 = vand.u32 %v185, 4294901760
    %187 = vmatpush1.msra.mxu0 %v186
    %188 = vmatprep.subr.mxu0 0.0
    %v189 = vand.u32 %v49, 4294901760
    %v190 = vsub.f32 %v49, %v189
    %v191 = vand.u32 %v190, 4294901760
    %v192 = vsub.f32 %v190, %v191
    %v193 = vand.u32 %v192, 4294901760
    %194 = vmatpush1.msra.mxu0 %v193
    %195 = vmatprep.subr.mxu0 0.0
    %196 = vmatpush2.msra.mxu0 0.0
    %197 = vmatprep.subr.mxu0 0.0
    %198 = vmatpush2.msra.mxu0 0.0
    %199 = vmatprep.subr.mxu0 0.0
    %200 = vmatpush2.msra.mxu0 0.0
    %201 = vmatprep.subr.mxu0 0.0
    %202 = vmatpush2.msra.mxu0 0.0
    %203 = vmatprep.subr.mxu0 0.0
    %204 = vmatpush2.msra.mxu0 0.0
    %205 = vmatprep.subr.mxu0 0.0
    %206 = vmatpush2.msra.mxu0 0.0
    %207 = vmatprep.subr.mxu0 0.0
    %208 = vmatpush2.msra.mxu0 0.0
    %209 = vmatprep.subr.mxu0 0.0
    %210 = vmatpush2.msra.mxu0 0.0
    %211 = vmatprep.subr.mxu0 0.0
    %212 = vmatpush2.msra.mxu0 0.0
    %213 = vmatprep.subr.mxu0 0.0
    %214 = vmatpush2.msra.mxu0 0.0
    %215 = vmatprep.subr.mxu0 0.0
    %216 = vmatpush2.msra.mxu0 0.0
    %217 = vmatprep.subr.mxu0 0.0
    %218 = vmatpush2.msra.mxu0 0.0
    %219 = vmatprep.subr.mxu0 0.0
    %220 = vmatpush2.msra.mxu0 0.0
    %221 = vmatprep.subr.mxu0 0.0
    %222 = vmatpush2.msra.mxu0 0.0
    %223 = vmatprep.subr.mxu0 0.0
    %224 = vmatpush2.msra.mxu0 0.0
    %225 = vmatprep.subr.mxu0 0.0
    %226 = vmatpush2.msra.mxu0 0.0
    %227 = vmatprep.mubr.f32.mxu0 0.0
    %v228 = vand.u32 %v62, 4294901760
    %229 = vmatmul.mubr.f32.gmra.mxu0 %v228
    %v230 = vpop.f32.mrf.mxu0
    %v231 = vadd.f32 %v140, %v230
    %v232 = vpop.f32.mrf.mxu0
    %233 = vdwg.mxu0
    %234 = vmatprep.subr.mxu0 0.0
    %235 = vmatpush1.msra.mxu0 0.0
    %236 = vmatprep.subr.mxu0 0.0
    %237 = vmatpush1.msra.mxu0 0.0
    %238 = vmatprep.subr.mxu0 0.0
    %239 = vmatpush1.msra.mxu0 0.0
    %240 = vmatprep.subr.mxu0 0.0
    %241 = vmatpush1.msra.mxu0 0.0
    %242 = vmatprep.subr.mxu0 0.0
    %243 = vmatpush1.msra.mxu0 0.0
    %244 = vmatprep.subr.mxu0 0.0
    %245 = vmatpush1.msra.mxu0 0.0
    %246 = vmatprep.subr.mxu0 0.0
    %247 = vmatpush1.msra.mxu0 0.0
    %248 = vmatprep.subr.mxu0 0.0
    %249 = vmatpush1.msra.mxu0 0.0
    %250 = vmatprep.subr.mxu0 0.0
    %251 = vmatpush1.msra.mxu0 0.0
    %252 = vmatprep.subr.mxu0 0.0
    %253 = vmatpush1.msra.mxu0 0.0
    %254 = vmatprep.subr.mxu0 0.0
    %255 = vmatpush1.msra.mxu0 0.0
    %256 = vmatprep.subr.mxu0 0.0
    %257 = vmatpush1.msra.mxu0 0.0
    %258 = vmatprep.subr.mxu0 0.0
    %v259 = vand.u32 %v52, 4294901760
    %v260 = vsub.f32 %v52, %v259
    %261 = vmatpush1.msra.mxu0 %v260
    %262 = vmatprep.subr.mxu0 0.0
    %v263 = vand.u32 %v51, 4294901760
    %v264 = vsub.f32 %v51, %v263
    %265 = vmatpush1.msra.mxu0 %v264
    %266 = vmatprep.subr.mxu0 0.0
    %v267 = vand.u32 %v50, 4294901760
    %v268 = vsub.f32 %v50, %v267
    %269 = vmatpush1.msra.mxu0 %v268
    %270 = vmatprep.subr.mxu0 0.0
    %v271 = vand.u32 %v49, 4294901760
    %v272 = vsub.f32 %v49, %v271
    %273 = vmatpush1.msra.mxu0 %v272
    %274 = vmatprep.subr.mxu0 0.0
    %275 = vmatpush2.msra.mxu0 0.0
    %276 = vmatprep.subr.mxu0 0.0
    %277 = vmatpush2.msra.mxu0 0.0
    %278 = vmatprep.subr.mxu0 0.0
    %279 = vmatpush2.msra.mxu0 0.0
    %280 = vmatprep.subr.mxu0 0.0
    %281 = vmatpush2.msra.mxu0 0.0
    %282 = vmatprep.subr.mxu0 0.0
    %283 = vmatpush2.msra.mxu0 0.0
    %284 = vmatprep.subr.mxu0 0.0
    %285 = vmatpush2.msra.mxu0 0.0
    %286 = vmatprep.subr.mxu0 0.0
    %287 = vmatpush2.msra.mxu0 0.0
    %288 = vmatprep.subr.mxu0 0.0
    %289 = vmatpush2.msra.mxu0 0.0
    %290 = vmatprep.subr.mxu0 0.0
    %291 = vmatpush2.msra.mxu0 0.0
    %292 = vmatprep.subr.mxu0 0.0
    %293 = vmatpush2.msra.mxu0 0.0
    %294 = vmatprep.subr.mxu0 0.0
    %295 = vmatpush2.msra.mxu0 0.0
    %296 = vmatprep.subr.mxu0 0.0
    %297 = vmatpush2.msra.mxu0 0.0
    %298 = vmatprep.subr.mxu0 0.0
    %299 = vmatpush2.msra.mxu0 0.0
    %300 = vmatprep.subr.mxu0 0.0
    %301 = vmatpush2.msra.mxu0 0.0
    %302 = vmatprep.subr.mxu0 0.0
    %303 = vmatpush2.msra.mxu0 0.0
    %304 = vmatprep.subr.mxu0 0.0
    %305 = vmatpush2.msra.mxu0 0.0
    %306 = vmatprep.mubr.f32.mxu0 0.0
    %v307 = vand.u32 %v62, 4294901760
    %v308 = vsub.f32 %v62, %v307
    %309 = vmatmul.mubr.f32.gmra.mxu0 %v308
    %v310 = vpop.f32.mrf.mxu0
    %v311 = vadd.f32 %v231, %v310
    %v312 = vpop.f32.mrf.mxu0
    %313 = vdwg.mxu0
    %314 = vmatprep.subr.mxu0 0.0
    %315 = vmatpush1.msra.mxu0 0.0
    %316 = vmatprep.subr.mxu0 0.0
    %317 = vmatpush1.msra.mxu0 0.0
    %318 = vmatprep.subr.mxu0 0.0
    %319 = vmatpush1.msra.mxu0 0.0
    %320 = vmatprep.subr.mxu0 0.0
    %321 = vmatpush1.msra.mxu0 0.0
    %322 = vmatprep.subr.mxu0 0.0
    %323 = vmatpush1.msra.mxu0 0.0
    %324 = vmatprep.subr.mxu0 0.0
    %325 = vmatpush1.msra.mxu0 0.0
    %326 = vmatprep.subr.mxu0 0.0
    %327 = vmatpush1.msra.mxu0 0.0
    %328 = vmatprep.subr.mxu0 0.0
    %329 = vmatpush1.msra.mxu0 0.0
    %330 = vmatprep.subr.mxu0 0.0
    %331 = vmatpush1.msra.mxu0 0.0
    %332 = vmatprep.subr.mxu0 0.0
    %333 = vmatpush1.msra.mxu0 0.0
    %334 = vmatprep.subr.mxu0 0.0
    %335 = vmatpush1.msra.mxu0 0.0
    %336 = vmatprep.subr.mxu0 0.0
    %337 = vmatpush1.msra.mxu0 0.0
    %338 = vmatprep.subr.mxu0 0.0
    %v339 = vand.u32 %v52, 4294901760
    %340 = vmatpush1.msra.mxu0 %v339
    %341 = vmatprep.subr.mxu0 0.0
    %v342 = vand.u32 %v51, 4294901760
    %343 = vmatpush1.msra.mxu0 %v342
    %344 = vmatprep.subr.mxu0 0.0
    %v345 = vand.u32 %v50, 4294901760
    %346 = vmatpush1.msra.mxu0 %v345
    %347 = vmatprep.subr.mxu0 0.0
    %v348 = vand.u32 %v49, 4294901760
    %349 = vmatpush1.msra.mxu0 %v348
    %350 = vmatprep.subr.mxu0 0.0
    %351 = vmatpush2.msra.mxu0 0.0
    %352 = vmatprep.subr.mxu0 0.0
    %353 = vmatpush2.msra.mxu0 0.0
    %354 = vmatprep.subr.mxu0 0.0
    %355 = vmatpush2.msra.mxu0 0.0
    %356 = vmatprep.subr.mxu0 0.0
    %357 = vmatpush2.msra.mxu0 0.0
    %358 = vmatprep.subr.mxu0 0.0
    %359 = vmatpush2.msra.mxu0 0.0
    %360 = vmatprep.subr.mxu0 0.0
    %361 = vmatpush2.msra.mxu0 0.0
    %362 = vmatprep.subr.mxu0 0.0
    %363 = vmatpush2.msra.mxu0 0.0
    %364 = vmatprep.subr.mxu0 0.0
    %365 = vmatpush2.msra.mxu0 0.0
    %366 = vmatprep.subr.mxu0 0.0
    %367 = vmatpush2.msra.mxu0 0.0
    %368 = vmatprep.subr.mxu0 0.0
    %369 = vmatpush2.msra.mxu0 0.0
    %370 = vmatprep.subr.mxu0 0.0
    %371 = vmatpush2.msra.mxu0 0.0
    %372 = vmatprep.subr.mxu0 0.0
    %373 = vmatpush2.msra.mxu0 0.0
    %374 = vmatprep.subr.mxu0 0.0
    %375 = vmatpush2.msra.mxu0 0.0
    %376 = vmatprep.subr.mxu0 0.0
    %377 = vmatpush2.msra.mxu0 0.0
    %378 = vmatprep.subr.mxu0 0.0
    %379 = vmatpush2.msra.mxu0 0.0
    %380 = vmatprep.subr.mxu0 0.0
    %381 = vmatpush2.msra.mxu0 0.0
    %382 = vmatprep.mubr.f32.mxu0 0.0
    %v383 = vand.u32 %v62, 4294901760
    %v384 = vsub.f32 %v62, %v383
    %v385 = vand.u32 %v384, 4294901760
    %386 = vmatmul.mubr.f32.gmra.mxu0 %v385
    %v387 = vpop.f32.mrf.mxu0
    %v388 = vadd.f32 %v311, %v387
    %v389 = vpop.f32.mrf.mxu0
    %390 = vdwg.mxu0
    %391 = vmatprep.subr.mxu0 0.0
    %392 = vmatpush1.msra.mxu0 0.0
    %393 = vmatprep.subr.mxu0 0.0
    %394 = vmatpush1.msra.mxu0 0.0
    %395 = vmatprep.subr.mxu0 0.0
    %396 = vmatpush1.msra.mxu0 0.0
    %397 = vmatprep.subr.mxu0 0.0
    %398 = vmatpush1.msra.mxu0 0.0
    %399 = vmatprep.subr.mxu0 0.0
    %400 = vmatpush1.msra.mxu0 0.0
    %401 = vmatprep.subr.mxu0 0.0
    %402 = vmatpush1.msra.mxu0 0.0
    %403 = vmatprep.subr.mxu0 0.0
    %404 = vmatpush1.msra.mxu0 0.0
    %405 = vmatprep.subr.mxu0 0.0
    %406 = vmatpush1.msra.mxu0 0.0
    %407 = vmatprep.subr.mxu0 0.0
    %408 = vmatpush1.msra.mxu0 0.0
    %409 = vmatprep.subr.mxu0 0.0
    %410 = vmatpush1.msra.mxu0 0.0
    %411 = vmatprep.subr.mxu0 0.0
    %412 = vmatpush1.msra.mxu0 0.0
    %413 = vmatprep.subr.mxu0 0.0
    %414 = vmatpush1.msra.mxu0 0.0
    %415 = vmatprep.subr.mxu0 0.0
    %v416 = vand.u32 %v52, 4294901760
    %v417 = vsub.f32 %v52, %v416
    %v418 = vand.u32 %v417, 4294901760
    %419 = vmatpush1.msra.mxu0 %v418
    %420 = vmatprep.subr.mxu0 0.0
    %v421 = vand.u32 %v51, 4294901760
    %v422 = vsub.f32 %v51, %v421
    %v423 = vand.u32 %v422, 4294901760
    %424 = vmatpush1.msra.mxu0 %v423
    %425 = vmatprep.subr.mxu0 0.0
    %v426 = vand.u32 %v50, 4294901760
    %v427 = vsub.f32 %v50, %v426
    %v428 = vand.u32 %v427, 4294901760
    %429 = vmatpush1.msra.mxu0 %v428
    %430 = vmatprep.subr.mxu0 0.0
    %v431 = vand.u32 %v49, 4294901760
    %v432 = vsub.f32 %v49, %v431
    %v433 = vand.u32 %v432, 4294901760
    %434 = vmatpush1.msra.mxu0 %v433
    %435 = vmatprep.subr.mxu0 0.0
    %436 = vmatpush2.msra.mxu0 0.0
    %437 = vmatprep.subr.mxu0 0.0
    %438 = vmatpush2.msra.mxu0 0.0
    %439 = vmatprep.subr.mxu0 0.0
    %440 = vmatpush2.msra.mxu0 0.0
    %441 = vmatprep.subr.mxu0 0.0
    %442 = vmatpush2.msra.mxu0 0.0
    %443 = vmatprep.subr.mxu0 0.0
    %444 = vmatpush2.msra.mxu0 0.0
    %445 = vmatprep.subr.mxu0 0.0
    %446 = vmatpush2.msra.mxu0 0.0
    %447 = vmatprep.subr.mxu0 0.0
    %448 = vmatpush2.msra.mxu0 0.0
    %449 = vmatprep.subr.mxu0 0.0
    %450 = vmatpush2.msra.mxu0 0.0
    %451 = vmatprep.subr.mxu0 0.0
    %452 = vmatpush2.msra.mxu0 0.0
    %453 = vmatprep.subr.mxu0 0.0
    %454 = vmatpush2.msra.mxu0 0.0
    %455 = vmatprep.subr.mxu0 0.0
    %456 = vmatpush2.msra.mxu0 0.0
    %457 = vmatprep.subr.mxu0 0.0
    %458 = vmatpush2.msra.mxu0 0.0
    %459 = vmatprep.subr.mxu0 0.0
    %460 = vmatpush2.msra.mxu0 0.0
    %461 = vmatprep.subr.mxu0 0.0
    %462 = vmatpush2.msra.mxu0 0.0
    %463 = vmatprep.subr.mxu0 0.0
    %464 = vmatpush2.msra.mxu0 0.0
    %465 = vmatprep.subr.mxu0 0.0
    %466 = vmatpush2.msra.mxu0 0.0
    %467 = vmatprep.mubr.f32.mxu0 0.0
    %v468 = vand.u32 %v62, 4294901760
    %469 = vmatmul.mubr.f32.gmra.mxu0 %v468
    %v470 = vpop.f32.mrf.mxu0
    %v471 = vadd.f32 %v388, %v470
    %v472 = vpop.f32.mrf.mxu0
    %473 = vdwg.mxu0
    %474 = vmatprep.subr.mxu0 0.0
    %475 = vmatpush1.msra.mxu0 0.0
    %476 = vmatprep.subr.mxu0 0.0
    %477 = vmatpush1.msra.mxu0 0.0
    %478 = vmatprep.subr.mxu0 0.0
    %479 = vmatpush1.msra.mxu0 0.0
    %480 = vmatprep.subr.mxu0 0.0
    %481 = vmatpush1.msra.mxu0 0.0
    %482 = vmatprep.subr.mxu0 0.0
    %483 = vmatpush1.msra.mxu0 0.0
    %484 = vmatprep.subr.mxu0 0.0
    %485 = vmatpush1.msra.mxu0 0.0
    %486 = vmatprep.subr.mxu0 0.0
    %487 = vmatpush1.msra.mxu0 0.0
    %488 = vmatprep.subr.mxu0 0.0
    %489 = vmatpush1.msra.mxu0 0.0
    %490 = vmatprep.subr.mxu0 0.0
    %491 = vmatpush1.msra.mxu0 0.0
    %492 = vmatprep.subr.mxu0 0.0
    %493 = vmatpush1.msra.mxu0 0.0
    %494 = vmatprep.subr.mxu0 0.0
    %495 = vmatpush1.msra.mxu0 0.0
    %496 = vmatprep.subr.mxu0 0.0
    %497 = vmatpush1.msra.mxu0 0.0
    %498 = vmatprep.subr.mxu0 0.0
    %v499 = vand.u32 %v52, 4294901760
    %500 = vmatpush1.msra.mxu0 %v499
    %501 = vmatprep.subr.mxu0 0.0
    %v502 = vand.u32 %v51, 4294901760
    %503 = vmatpush1.msra.mxu0 %v502
    %504 = vmatprep.subr.mxu0 0.0
    %v505 = vand.u32 %v50, 4294901760
    %506 = vmatpush1.msra.mxu0 %v505
    %507 = vmatprep.subr.mxu0 0.0
    %v508 = vand.u32 %v49, 4294901760
    %509 = vmatpush1.msra.mxu0 %v508
    %510 = vmatprep.subr.mxu0 0.0
    %511 = vmatpush2.msra.mxu0 0.0
    %512 = vmatprep.subr.mxu0 0.0
    %513 = vmatpush2.msra.mxu0 0.0
    %514 = vmatprep.subr.mxu0 0.0
    %515 = vmatpush2.msra.mxu0 0.0
    %516 = vmatprep.subr.mxu0 0.0
    %517 = vmatpush2.msra.mxu0 0.0
    %518 = vmatprep.subr.mxu0 0.0
    %519 = vmatpush2.msra.mxu0 0.0
    %520 = vmatprep.subr.mxu0 0.0
    %521 = vmatpush2.msra.mxu0 0.0
    %522 = vmatprep.subr.mxu0 0.0
    %523 = vmatpush2.msra.mxu0 0.0
    %524 = vmatprep.subr.mxu0 0.0
    %525 = vmatpush2.msra.mxu0 0.0
    %526 = vmatprep.subr.mxu0 0.0
    %527 = vmatpush2.msra.mxu0 0.0
    %528 = vmatprep.subr.mxu0 0.0
    %529 = vmatpush2.msra.mxu0 0.0
    %530 = vmatprep.subr.mxu0 0.0
    %531 = vmatpush2.msra.mxu0 0.0
    %532 = vmatprep.subr.mxu0 0.0
    %533 = vmatpush2.msra.mxu0 0.0
    %534 = vmatprep.subr.mxu0 0.0
    %535 = vmatpush2.msra.mxu0 0.0
    %536 = vmatprep.subr.mxu0 0.0
    %537 = vmatpush2.msra.mxu0 0.0
    %538 = vmatprep.subr.mxu0 0.0
    %539 = vmatpush2.msra.mxu0 0.0
    %540 = vmatprep.subr.mxu0 0.0
    %541 = vmatpush2.msra.mxu0 0.0
    %542 = vmatprep.mubr.f32.mxu0 0.0
    %v543 = vand.u32 %v62, 4294901760
    %544 = vmatmul.mubr.f32.gmra.mxu0 %v543
    %v545 = vpop.f32.mrf.mxu0
    %v546 = vadd.f32 %v471, %v545
    %v547 = vpop.f32.mrf.mxu0
    %548 = vdwg.mxu0
    %v549 = vmax.f32 %v546, 0.0
    %v550 = vld [vmem:[#allocation4] sm:$0xff]
    %v551 = vld [vmem:[#allocation4 + $0x8] sm:$0xff]
    %v552 = vld [vmem:[#allocation4 + $0x10] sm:$0xff]
    %v553 = vld [vmem:[#allocation4 + $0x18] sm:$0xff]
    %v554 = vld [vmem:[#allocation4 + $0x20] sm:$0xff]
    %v555 = vld [vmem:[#allocation4 + $0x28] sm:$0xff]
    %v556 = vld [vmem:[#allocation4 + $0x30] sm:$0xff]
    %v557 = vld [vmem:[#allocation4 + $0x38] sm:$0xff]
    %v558 = vld [vmem:[#allocation4 + $0x40] sm:$0xff]
    %v559 = vld [vmem:[#allocation4 + $0x48] sm:$0xff]
    %v560 = vld [vmem:[#allocation4 + $0x50] sm:$0xff]
    %v561 = vld [vmem:[#allocation4 + $0x58] sm:$0xff]
    %v562 = vld [vmem:[#allocation4 + $0x60] sm:$0xff]
    %v563 = vld [vmem:[#allocation4 + $0x68] sm:$0xff]
    %v564 = vld [vmem:[#allocation4 + $0x70] sm:$0xff]
    %v565 = vld [vmem:[#allocation4 + $0x78] sm:$0xff]
    %v566 = vld [vmem:[%s4] sm:$0x1]
    %v568 = vlaneseq
    %v569 = vshrl.u32 %v568, 7
    %v570 = vsub.s32 0, %v569
    %v571 = vrot.slane %v566, %v570
    %573 = vmatprep.subr.mxu0 0.0
    %v574 = vand.u32 %v565, 4294901760
    %575 = vmatpush1.msra.mxu0 %v574
    %576 = vmatprep.subr.mxu0 0.0
    %v577 = vand.u32 %v564, 4294901760
    %578 = vmatpush1.msra.mxu0 %v577
    %579 = vmatprep.subr.mxu0 0.0
    %v580 = vand.u32 %v563, 4294901760
    %581 = vmatpush1.msra.mxu0 %v580
    %582 = vmatprep.subr.mxu0 0.0
    %v583 = vand.u32 %v562, 4294901760
    %584 = vmatpush1.msra.mxu0 %v583
    %585 = vmatprep.subr.mxu0 0.0
    %v586 = vand.u32 %v561, 4294901760
    %587 = vmatpush1.msra.mxu0 %v586
    %588 = vmatprep.subr.mxu0 0.0
    %v589 = vand.u32 %v560, 4294901760
    %590 = vmatpush1.msra.mxu0 %v589
    %591 = vmatprep.subr.mxu0 0.0
    %v592 = vand.u32 %v559, 4294901760
    %593 = vmatpush1.msra.mxu0 %v592
    %594 = vmatprep.subr.mxu0 0.0
    %v595 = vand.u32 %v558, 4294901760
    %596 = vmatpush1.msra.mxu0 %v595
    %597 = vmatprep.subr.mxu0 0.0
    %v598 = vand.u32 %v557, 4294901760
    %599 = vmatpush1.msra.mxu0 %v598
    %600 = vmatprep.subr.mxu0 0.0
    %v601 = vand.u32 %v556, 4294901760
    %602 = vmatpush1.msra.mxu0 %v601
    %603 = vmatprep.subr.mxu0 0.0
    %v604 = vand.u32 %v555, 4294901760
    %605 = vmatpush1.msra.mxu0 %v604
    %606 = vmatprep.subr.mxu0 0.0
    %v607 = vand.u32 %v554, 4294901760
    %608 = vmatpush1.msra.mxu0 %v607
    %609 = vmatprep.subr.mxu0 0.0
    %v610 = vand.u32 %v553, 4294901760
    %611 = vmatpush1.msra.mxu0 %v610
    %612 = vmatprep.subr.mxu0 0.0
    %v613 = vand.u32 %v552, 4294901760
    %614 = vmatpush1.msra.mxu0 %v613
    %615 = vmatprep.subr.mxu0 0.0
    %v616 = vand.u32 %v551, 4294901760
    %617 = vmatpush1.msra.mxu0 %v616
    %618 = vmatprep.subr.mxu0 0.0
    %v619 = vand.u32 %v550, 4294901760
    %620 = vmatpush1.msra.mxu0 %v619
    %621 = vmatprep.subr.mxu0 0.0
    %622 = vmatpush2.msra.mxu0 0.0
    %623 = vmatprep.subr.mxu0 0.0
    %624 = vmatpush2.msra.mxu0 0.0
    %625 = vmatprep.subr.mxu0 0.0
    %626 = vmatpush2.msra.mxu0 0.0
    %627 = vmatprep.subr.mxu0 0.0
    %628 = vmatpush2.msra.mxu0 0.0
    %629 = vmatprep.subr.mxu0 0.0
    %630 = vmatpush2.msra.mxu0 0.0
    %631 = vmatprep.subr.mxu0 0.0
    %632 = vmatpush2.msra.mxu0 0.0
    %633 = vmatprep.subr.mxu0 0.0
    %634 = vmatpush2.msra.mxu0 0.0
    %635 = vmatprep.subr.mxu0 0.0
    %636 = vmatpush2.msra.mxu0 0.0
    %637 = vmatprep.subr.mxu0 0.0
    %638 = vmatpush2.msra.mxu0 0.0
    %639 = vmatprep.subr.mxu0 0.0
    %640 = vmatpush2.msra.mxu0 0.0
    %641 = vmatprep.subr.mxu0 0.0
    %642 = vmatpush2.msra.mxu0 0.0
    %643 = vmatprep.subr.mxu0 0.0
    %644 = vmatpush2.msra.mxu0 0.0
    %645 = vmatprep.subr.mxu0 0.0
    %646 = vmatpush2.msra.mxu0 0.0
    %647 = vmatprep.subr.mxu0 0.0
    %648 = vmatpush2.msra.mxu0 0.0
    %649 = vmatprep.subr.mxu0 0.0
    %650 = vmatpush2.msra.mxu0 0.0
    %651 = vmatprep.subr.mxu0 0.0
    %652 = vmatpush2.msra.mxu0 0.0
    %653 = vmatprep.mubr.f32.mxu0 0.0
    %v654 = vand.u32 %v549, 4294901760
    %v655 = vsub.f32 %v549, %v654
    %v656 = vand.u32 %v655, 4294901760
    %v657 = vsub.f32 %v655, %v656
    %v658 = vand.u32 %v657, 4294901760
    %659 = vmatmul.mubr.f32.gmra.mxu0 %v658
    %v660 = vpop.f32.mrf.mxu0
    %v661 = vadd.f32 %v571, %v660
    %v662 = vpop.f32.mrf.mxu0
    %663 = vdwg.mxu0
    %664 = vmatprep.subr.mxu0 0.0
    %v665 = vand.u32 %v565, 4294901760
    %v666 = vsub.f32 %v565, %v665
    %v667 = vand.u32 %v666, 4294901760
    %v668 = vsub.f32 %v666, %v667
    %v669 = vand.u32 %v668, 4294901760
    %670 = vmatpush1.msra.mxu0 %v669
    %671 = vmatprep.subr.mxu0 0.0
    %v672 = vand.u32 %v564, 4294901760
    %v673 = vsub.f32 %v564, %v672
    %v674 = vand.u32 %v673, 4294901760
    %v675 = vsub.f32 %v673, %v674
    %v676 = vand.u32 %v675, 4294901760
    %677 = vmatpush1.msra.mxu0 %v676
    %678 = vmatprep.subr.mxu0 0.0
    %v679 = vand.u32 %v563, 4294901760
    %v680 = vsub.f32 %v563, %v679
    %v681 = vand.u32 %v680, 4294901760
    %v682 = vsub.f32 %v680, %v681
    %v683 = vand.u32 %v682, 4294901760
    %684 = vmatpush1.msra.mxu0 %v683
    %685 = vmatprep.subr.mxu0 0.0
    %v686 = vand.u32 %v562, 4294901760
    %v687 = vsub.f32 %v562, %v686
    %v688 = vand.u32 %v687, 4294901760
    %v689 = vsub.f32 %v687, %v688
    %v690 = vand.u32 %v689, 4294901760
    %691 = vmatpush1.msra.mxu0 %v690
    %692 = vmatprep.subr.mxu0 0.0
    %v693 = vand.u32 %v561, 4294901760
    %v694 = vsub.f32 %v561, %v693
    %v695 = vand.u32 %v694, 4294901760
    %v696 = vsub.f32 %v694, %v695
    %v697 = vand.u32 %v696, 4294901760
    %698 = vmatpush1.msra.mxu0 %v697
    %699 = vmatprep.subr.mxu0 0.0
    %v700 = vand.u32 %v560, 4294901760
    %v701 = vsub.f32 %v560, %v700
    %v702 = vand.u32 %v701, 4294901760
    %v703 = vsub.f32 %v701, %v702
    %v704 = vand.u32 %v703, 4294901760
    %705 = vmatpush1.msra.mxu0 %v704
    %706 = vmatprep.subr.mxu0 0.0
    %v707 = vand.u32 %v559, 4294901760
    %v708 = vsub.f32 %v559, %v707
    %v709 = vand.u32 %v708, 4294901760
    %v710 = vsub.f32 %v708, %v709
    %v711 = vand.u32 %v710, 4294901760
    %712 = vmatpush1.msra.mxu0 %v711
    %713 = vmatprep.subr.mxu0 0.0
    %v714 = vand.u32 %v558, 4294901760
    %v715 = vsub.f32 %v558, %v714
    %v716 = vand.u32 %v715, 4294901760
    %v717 = vsub.f32 %v715, %v716
    %v718 = vand.u32 %v717, 4294901760
    %719 = vmatpush1.msra.mxu0 %v718
    %720 = vmatprep.subr.mxu0 0.0
    %v721 = vand.u32 %v557, 4294901760
    %v722 = vsub.f32 %v557, %v721
    %v723 = vand.u32 %v722, 4294901760
    %v724 = vsub.f32 %v722, %v723
    %v725 = vand.u32 %v724, 4294901760
    %726 = vmatpush1.msra.mxu0 %v725
    %727 = vmatprep.subr.mxu0 0.0
    %v728 = vand.u32 %v556, 4294901760
    %v729 = vsub.f32 %v556, %v728
    %v730 = vand.u32 %v729, 4294901760
    %v731 = vsub.f32 %v729, %v730
    %v732 = vand.u32 %v731, 4294901760
    %733 = vmatpush1.msra.mxu0 %v732
    %734 = vmatprep.subr.mxu0 0.0
    %v735 = vand.u32 %v555, 4294901760
    %v736 = vsub.f32 %v555, %v735
    %v737 = vand.u32 %v736, 4294901760
    %v738 = vsub.f32 %v736, %v737
    %v739 = vand.u32 %v738, 4294901760
    %740 = vmatpush1.msra.mxu0 %v739
    %741 = vmatprep.subr.mxu0 0.0
    %v742 = vand.u32 %v554, 4294901760
    %v743 = vsub.f32 %v554, %v742
    %v744 = vand.u32 %v743, 4294901760
    %v745 = vsub.f32 %v743, %v744
    %v746 = vand.u32 %v745, 4294901760
    %747 = vmatpush1.msra.mxu0 %v746
    %748 = vmatprep.subr.mxu0 0.0
    %v749 = vand.u32 %v553, 4294901760
    %v750 = vsub.f32 %v553, %v749
    %v751 = vand.u32 %v750, 4294901760
    %v752 = vsub.f32 %v750, %v751
    %v753 = vand.u32 %v752, 4294901760
    %754 = vmatpush1.msra.mxu0 %v753
    %755 = vmatprep.subr.mxu0 0.0
    %v756 = vand.u32 %v552, 4294901760
    %v757 = vsub.f32 %v552, %v756
    %v758 = vand.u32 %v757, 4294901760
    %v759 = vsub.f32 %v757, %v758
    %v760 = vand.u32 %v759, 4294901760
    %761 = vmatpush1.msra.mxu0 %v760
    %762 = vmatprep.subr.mxu0 0.0
    %v763 = vand.u32 %v551, 4294901760
    %v764 = vsub.f32 %v551, %v763
    %v765 = vand.u32 %v764, 4294901760
    %v766 = vsub.f32 %v764, %v765
    %v767 = vand.u32 %v766, 4294901760
    %768 = vmatpush1.msra.mxu0 %v767
    %769 = vmatprep.subr.mxu0 0.0
    %v770 = vand.u32 %v550, 4294901760
    %v771 = vsub.f32 %v550, %v770
    %v772 = vand.u32 %v771, 4294901760
    %v773 = vsub.f32 %v771, %v772
    %v774 = vand.u32 %v773, 4294901760
    %775 = vmatpush1.msra.mxu0 %v774
    %776 = vmatprep.subr.mxu0 0.0
    %777 = vmatpush2.msra.mxu0 0.0
    %778 = vmatprep.subr.mxu0 0.0
    %779 = vmatpush2.msra.mxu0 0.0
    %780 = vmatprep.subr.mxu0 0.0
    %781 = vmatpush2.msra.mxu0 0.0
    %782 = vmatprep.subr.mxu0 0.0
    %783 = vmatpush2.msra.mxu0 0.0
    %784 = vmatprep.subr.mxu0 0.0
    %785 = vmatpush2.msra.mxu0 0.0
    %786 = vmatprep.subr.mxu0 0.0
    %787 = vmatpush2.msra.mxu0 0.0
    %788 = vmatprep.subr.mxu0 0.0
    %789 = vmatpush2.msra.mxu0 0.0
    %790 = vmatprep.subr.mxu0 0.0
    %791 = vmatpush2.msra.mxu0 0.0
    %792 = vmatprep.subr.mxu0 0.0
    %793 = vmatpush2.msra.mxu0 0.0
    %794 = vmatprep.subr.mxu0 0.0
    %795 = vmatpush2.msra.mxu0 0.0
    %796 = vmatprep.subr.mxu0 0.0
    %797 = vmatpush2.msra.mxu0 0.0
    %798 = vmatprep.subr.mxu0 0.0
    %799 = vmatpush2.msra.mxu0 0.0
    %800 = vmatprep.subr.mxu0 0.0
    %801 = vmatpush2.msra.mxu0 0.0
    %802 = vmatprep.subr.mxu0 0.0
    %803 = vmatpush2.msra.mxu0 0.0
    %804 = vmatprep.subr.mxu0 0.0
    %805 = vmatpush2.msra.mxu0 0.0
    %806 = vmatprep.subr.mxu0 0.0
    %807 = vmatpush2.msra.mxu0 0.0
    %808 = vmatprep.mubr.f32.mxu0 0.0
    %v809 = vand.u32 %v549, 4294901760
    %810 = vmatmul.mubr.f32.gmra.mxu0 %v809
    %v811 = vpop.f32.mrf.mxu0
    %v812 = vadd.f32 %v661, %v811
    %v813 = vpop.f32.mrf.mxu0
    %814 = vdwg.mxu0
    %815 = vmatprep.subr.mxu0 0.0
    %v816 = vand.u32 %v565, 4294901760
    %v817 = vsub.f32 %v565, %v816
    %818 = vmatpush1.msra.mxu0 %v817
    %819 = vmatprep.subr.mxu0 0.0
    %v820 = vand.u32 %v564, 4294901760
    %v821 = vsub.f32 %v564, %v820
    %822 = vmatpush1.msra.mxu0 %v821
    %823 = vmatprep.subr.mxu0 0.0
    %v824 = vand.u32 %v563, 4294901760
    %v825 = vsub.f32 %v563, %v824
    %826 = vmatpush1.msra.mxu0 %v825
    %827 = vmatprep.subr.mxu0 0.0
    %v828 = vand.u32 %v562, 4294901760
    %v829 = vsub.f32 %v562, %v828
    %830 = vmatpush1.msra.mxu0 %v829
    %831 = vmatprep.subr.mxu0 0.0
    %v832 = vand.u32 %v561, 4294901760
    %v833 = vsub.f32 %v561, %v832
    %834 = vmatpush1.msra.mxu0 %v833
    %835 = vmatprep.subr.mxu0 0.0
    %v836 = vand.u32 %v560, 4294901760
    %v837 = vsub.f32 %v560, %v836
    %838 = vmatpush1.msra.mxu0 %v837
    %839 = vmatprep.subr.mxu0 0.0
    %v840 = vand.u32 %v559, 4294901760
    %v841 = vsub.f32 %v559, %v840
    %842 = vmatpush1.msra.mxu0 %v841
    %843 = vmatprep.subr.mxu0 0.0
    %v844 = vand.u32 %v558, 4294901760
    %v845 = vsub.f32 %v558, %v844
    %846 = vmatpush1.msra.mxu0 %v845
    %847 = vmatprep.subr.mxu0 0.0
    %v848 = vand.u32 %v557, 4294901760
    %v849 = vsub.f32 %v557, %v848
    %850 = vmatpush1.msra.mxu0 %v849
    %851 = vmatprep.subr.mxu0 0.0
    %v852 = vand.u32 %v556, 4294901760
    %v853 = vsub.f32 %v556, %v852
    %854 = vmatpush1.msra.mxu0 %v853
    %855 = vmatprep.subr.mxu0 0.0
    %v856 = vand.u32 %v555, 4294901760
    %v857 = vsub.f32 %v555, %v856
    %858 = vmatpush1.msra.mxu0 %v857
    %859 = vmatprep.subr.mxu0 0.0
    %v860 = vand.u32 %v554, 4294901760
    %v861 = vsub.f32 %v554, %v860
    %862 = vmatpush1.msra.mxu0 %v861
    %863 = vmatprep.subr.mxu0 0.0
    %v864 = vand.u32 %v553, 4294901760
    %v865 = vsub.f32 %v553, %v864
    %866 = vmatpush1.msra.mxu0 %v865
    %867 = vmatprep.subr.mxu0 0.0
    %v868 = vand.u32 %v552, 4294901760
    %v869 = vsub.f32 %v552, %v868
    %870 = vmatpush1.msra.mxu0 %v869
    %871 = vmatprep.subr.mxu0 0.0
    %v872 = vand.u32 %v551, 4294901760
    %v873 = vsub.f32 %v551, %v872
    %874 = vmatpush1.msra.mxu0 %v873
    %875 = vmatprep.subr.mxu0 0.0
    %v876 = vand.u32 %v550, 4294901760
    %v877 = vsub.f32 %v550, %v876
    %878 = vmatpush1.msra.mxu0 %v877
    %879 = vmatprep.subr.mxu0 0.0
    %880 = vmatpush2.msra.mxu0 0.0
    %881 = vmatprep.subr.mxu0 0.0
    %882 = vmatpush2.msra.mxu0 0.0
    %883 = vmatprep.subr.mxu0 0.0
    %884 = vmatpush2.msra.mxu0 0.0
    %885 = vmatprep.subr.mxu0 0.0
    %886 = vmatpush2.msra.mxu0 0.0
    %887 = vmatprep.subr.mxu0 0.0
    %888 = vmatpush2.msra.mxu0 0.0
    %889 = vmatprep.subr.mxu0 0.0
    %890 = vmatpush2.msra.mxu0 0.0
    %891 = vmatprep.subr.mxu0 0.0
    %892 = vmatpush2.msra.mxu0 0.0
    %893 = vmatprep.subr.mxu0 0.0
    %894 = vmatpush2.msra.mxu0 0.0
    %895 = vmatprep.subr.mxu0 0.0
    %896 = vmatpush2.msra.mxu0 0.0
    %897 = vmatprep.subr.mxu0 0.0
    %898 = vmatpush2.msra.mxu0 0.0
    %899 = vmatprep.subr.mxu0 0.0
    %900 = vmatpush2.msra.mxu0 0.0
    %901 = vmatprep.subr.mxu0 0.0
    %902 = vmatpush2.msra.mxu0 0.0
    %903 = vmatprep.subr.mxu0 0.0
    %904 = vmatpush2.msra.mxu0 0.0
    %905 = vmatprep.subr.mxu0 0.0
    %906 = vmatpush2.msra.mxu0 0.0
    %907 = vmatprep.subr.mxu0 0.0
    %908 = vmatpush2.msra.mxu0 0.0
    %909 = vmatprep.subr.mxu0 0.0
    %910 = vmatpush2.msra.mxu0 0.0
    %911 = vmatprep.mubr.f32.mxu0 0.0
    %v912 = vand.u32 %v549, 4294901760
    %v913 = vsub.f32 %v549, %v912
    %914 = vmatmul.mubr.f32.gmra.mxu0 %v913
    %v915 = vpop.f32.mrf.mxu0
    %v916 = vadd.f32 %v812, %v915
    %v917 = vpop.f32.mrf.mxu0
    %918 = vdwg.mxu0
    %919 = vmatprep.subr.mxu0 0.0
    %v920 = vand.u32 %v565, 4294901760
    %921 = vmatpush1.msra.mxu0 %v920
    %922 = vmatprep.subr.mxu0 0.0
    %v923 = vand.u32 %v564, 4294901760
    %924 = vmatpush1.msra.mxu0 %v923
    %925 = vmatprep.subr.mxu0 0.0
    %v926 = vand.u32 %v563, 4294901760
    %927 = vmatpush1.msra.mxu0 %v926
    %928 = vmatprep.subr.mxu0 0.0
    %v929 = vand.u32 %v562, 4294901760
    %930 = vmatpush1.msra.mxu0 %v929
    %931 = vmatprep.subr.mxu0 0.0
    %v932 = vand.u32 %v561, 4294901760
    %933 = vmatpush1.msra.mxu0 %v932
    %934 = vmatprep.subr.mxu0 0.0
    %v935 = vand.u32 %v560, 4294901760
    %936 = vmatpush1.msra.mxu0 %v935
    %937 = vmatprep.subr.mxu0 0.0
    %v938 = vand.u32 %v559, 4294901760
    %939 = vmatpush1.msra.mxu0 %v938
    %940 = vmatprep.subr.mxu0 0.0
    %v941 = vand.u32 %v558, 4294901760
    %942 = vmatpush1.msra.mxu0 %v941
    %943 = vmatprep.subr.mxu0 0.0
    %v944 = vand.u32 %v557, 4294901760
    %945 = vmatpush1.msra.mxu0 %v944
    %946 = vmatprep.subr.mxu0 0.0
    %v947 = vand.u32 %v556, 4294901760
    %948 = vmatpush1.msra.mxu0 %v947
    %949 = vmatprep.subr.mxu0 0.0
    %v950 = vand.u32 %v555, 4294901760
    %951 = vmatpush1.msra.mxu0 %v950
    %952 = vmatprep.subr.mxu0 0.0
    %v953 = vand.u32 %v554, 4294901760
    %954 = vmatpush1.msra.mxu0 %v953
    %955 = vmatprep.subr.mxu0 0.0
    %v956 = vand.u32 %v553, 4294901760
    %957 = vmatpush1.msra.mxu0 %v956
    %958 = vmatprep.subr.mxu0 0.0
    %v959 = vand.u32 %v552, 4294901760
    %960 = vmatpush1.msra.mxu0 %v959
    %961 = vmatprep.subr.mxu0 0.0
    %v962 = vand.u32 %v551, 4294901760
    %963 = vmatpush1.msra.mxu0 %v962
    %964 = vmatprep.subr.mxu0 0.0
    %v965 = vand.u32 %v550, 4294901760
    %966 = vmatpush1.msra.mxu0 %v965
    %967 = vmatprep.subr.mxu0 0.0
    %968 = vmatpush2.msra.mxu0 0.0
    %969 = vmatprep.subr.mxu0 0.0
    %970 = vmatpush2.msra.mxu0 0.0
    %971 = vmatprep.subr.mxu0 0.0
    %972 = vmatpush2.msra.mxu0 0.0
    %973 = vmatprep.subr.mxu0 0.0
    %974 = vmatpush2.msra.mxu0 0.0
    %975 = vmatprep.subr.mxu0 0.0
    %976 = vmatpush2.msra.mxu0 0.0
    %977 = vmatprep.subr.mxu0 0.0
    %978 = vmatpush2.msra.mxu0 0.0
    %979 = vmatprep.subr.mxu0 0.0
    %980 = vmatpush2.msra.mxu0 0.0
    %981 = vmatprep.subr.mxu0 0.0
    %982 = vmatpush2.msra.mxu0 0.0
    %983 = vmatprep.subr.mxu0 0.0
    %984 = vmatpush2.msra.mxu0 0.0
    %985 = vmatprep.subr.mxu0 0.0
    %986 = vmatpush2.msra.mxu0 0.0
    %987 = vmatprep.subr.mxu0 0.0
    %988 = vmatpush2.msra.mxu0 0.0
    %989 = vmatprep.subr.mxu0 0.0
    %990 = vmatpush2.msra.mxu0 0.0
    %991 = vmatprep.subr.mxu0 0.0
    %992 = vmatpush2.msra.mxu0 0.0
    %993 = vmatprep.subr.mxu0 0.0
    %994 = vmatpush2.msra.mxu0 0.0
    %995 = vmatprep.subr.mxu0 0.0
    %996 = vmatpush2.msra.mxu0 0.0
    %997 = vmatprep.subr.mxu0 0.0
    %998 = vmatpush2.msra.mxu0 0.0
    %999 = vmatprep.mubr.f32.mxu0 0.0
    %v1000 = vand.u32 %v549, 4294901760
    %v1001 = vsub.f32 %v549, %v1000
    %v1002 = vand.u32 %v1001, 4294901760
    %1003 = vmatmul.mubr.f32.gmra.mxu0 %v1002
    %v1004 = vpop.f32.mrf.mxu0
    %v1005 = vadd.f32 %v916, %v1004
    %v1006 = vpop.f32.mrf.mxu0
    %1007 = vdwg.mxu0
    %1008 = vmatprep.subr.mxu0 0.0
    %v1009 = vand.u32 %v565, 4294901760
    %v1010 = vsub.f32 %v565, %v1009
    %v1011 = vand.u32 %v1010, 4294901760
    %1012 = vmatpush1.msra.mxu0 %v1011
    %1013 = vmatprep.subr.mxu0 0.0
    %v1014 = vand.u32 %v564, 4294901760
    %v1015 = vsub.f32 %v564, %v1014
    %v1016 = vand.u32 %v1015, 4294901760
    %1017 = vmatpush1.msra.mxu0 %v1016
    %1018 = vmatprep.subr.mxu0 0.0
    %v1019 = vand.u32 %v563, 4294901760
    %v1020 = vsub.f32 %v563, %v1019
    %v1021 = vand.u32 %v1020, 4294901760
    %1022 = vmatpush1.msra.mxu0 %v1021
    %1023 = vmatprep.subr.mxu0 0.0
    %v1024 = vand.u32 %v562, 4294901760
    %v1025 = vsub.f32 %v562, %v1024
    %v1026 = vand.u32 %v1025, 4294901760
    %1027 = vmatpush1.msra.mxu0 %v1026
    %1028 = vmatprep.subr.mxu0 0.0
    %v1029 = vand.u32 %v561, 4294901760
    %v1030 = vsub.f32 %v561, %v1029
    %v1031 = vand.u32 %v1030, 4294901760
    %1032 = vmatpush1.msra.mxu0 %v1031
    %1033 = vmatprep.subr.mxu0 0.0
    %v1034 = vand.u32 %v560, 4294901760
    %v1035 = vsub.f32 %v560, %v1034
    %v1036 = vand.u32 %v1035, 4294901760
    %1037 = vmatpush1.msra.mxu0 %v1036
    %1038 = vmatprep.subr.mxu0 0.0
    %v1039 = vand.u32 %v559, 4294901760
    %v1040 = vsub.f32 %v559, %v1039
    %v1041 = vand.u32 %v1040, 4294901760
    %1042 = vmatpush1.msra.mxu0 %v1041
    %1043 = vmatprep.subr.mxu0 0.0
    %v1044 = vand.u32 %v558, 4294901760
    %v1045 = vsub.f32 %v558, %v1044
    %v1046 = vand.u32 %v1045, 4294901760
    %1047 = vmatpush1.msra.mxu0 %v1046
    %1048 = vmatprep.subr.mxu0 0.0
    %v1049 = vand.u32 %v557, 4294901760
    %v1050 = vsub.f32 %v557, %v1049
    %v1051 = vand.u32 %v1050, 4294901760
    %1052 = vmatpush1.msra.mxu0 %v1051
    %1053 = vmatprep.subr.mxu0 0.0
    %v1054 = vand.u32 %v556, 4294901760
    %v1055 = vsub.f32 %v556, %v1054
    %v1056 = vand.u32 %v1055, 4294901760
    %1057 = vmatpush1.msra.mxu0 %v1056
    %1058 = vmatprep.subr.mxu0 0.0
    %v1059 = vand.u32 %v555, 4294901760
    %v1060 = vsub.f32 %v555, %v1059
    %v1061 = vand.u32 %v1060, 4294901760
    %1062 = vmatpush1.msra.mxu0 %v1061
    %1063 = vmatprep.subr.mxu0 0.0
    %v1064 = vand.u32 %v554, 4294901760
    %v1065 = vsub.f32 %v554, %v1064
    %v1066 = vand.u32 %v1065, 4294901760
    %1067 = vmatpush1.msra.mxu0 %v1066
    %1068 = vmatprep.subr.mxu0 0.0
    %v1069 = vand.u32 %v553, 4294901760
    %v1070 = vsub.f32 %v553, %v1069
    %v1071 = vand.u32 %v1070, 4294901760
    %1072 = vmatpush1.msra.mxu0 %v1071
    %1073 = vmatprep.subr.mxu0 0.0
    %v1074 = vand.u32 %v552, 4294901760
    %v1075 = vsub.f32 %v552, %v1074
    %v1076 = vand.u32 %v1075, 4294901760
    %1077 = vmatpush1.msra.mxu0 %v1076
    %1078 = vmatprep.subr.mxu0 0.0
    %v1079 = vand.u32 %v551, 4294901760
    %v1080 = vsub.f32 %v551, %v1079
    %v1081 = vand.u32 %v1080, 4294901760
    %1082 = vmatpush1.msra.mxu0 %v1081
    %1083 = vmatprep.subr.mxu0 0.0
    %v1084 = vand.u32 %v550, 4294901760
    %v1085 = vsub.f32 %v550, %v1084
    %v1086 = vand.u32 %v1085, 4294901760
    %1087 = vmatpush1.msra.mxu0 %v1086
    %1088 = vmatprep.subr.mxu0 0.0
    %1089 = vmatpush2.msra.mxu0 0.0
    %1090 = vmatprep.subr.mxu0 0.0
    %1091 = vmatpush2.msra.mxu0 0.0
    %1092 = vmatprep.subr.mxu0 0.0
    %1093 = vmatpush2.msra.mxu0 0.0
    %1094 = vmatprep.subr.mxu0 0.0
    %1095 = vmatpush2.msra.mxu0 0.0
    %1096 = vmatprep.subr.mxu0 0.0
    %1097 = vmatpush2.msra.mxu0 0.0
    %1098 = vmatprep.subr.mxu0 0.0
    %1099 = vmatpush2.msra.mxu0 0.0
    %1100 = vmatprep.subr.mxu0 0.0
    %1101 = vmatpush2.msra.mxu0 0.0
    %1102 = vmatprep.subr.mxu0 0.0
    %1103 = vmatpush2.msra.mxu0 0.0
    %1104 = vmatprep.subr.mxu0 0.0
    %1105 = vmatpush2.msra.mxu0 0.0
    %1106 = vmatprep.subr.mxu0 0.0
    %1107 = vmatpush2.msra.mxu0 0.0
    %1108 = vmatprep.subr.mxu0 0.0
    %1109 = vmatpush2.msra.mxu0 0.0
    %1110 = vmatprep.subr.mxu0 0.0
    %1111 = vmatpush2.msra.mxu0 0.0
    %1112 = vmatprep.subr.mxu0 0.0
    %1113 = vmatpush2.msra.mxu0 0.0
    %1114 = vmatprep.subr.mxu0 0.0
    %1115 = vmatpush2.msra.mxu0 0.0
    %1116 = vmatprep.subr.mxu0 0.0
    %1117 = vmatpush2.msra.mxu0 0.0
    %1118 = vmatprep.subr.mxu0 0.0
    %1119 = vmatpush2.msra.mxu0 0.0
    %1120 = vmatprep.mubr.f32.mxu0 0.0
    %v1121 = vand.u32 %v549, 4294901760
    %1122 = vmatmul.mubr.f32.gmra.mxu0 %v1121
    %v1123 = vpop.f32.mrf.mxu0
    %v1124 = vadd.f32 %v1005, %v1123
    %v1125 = vpop.f32.mrf.mxu0
    %1126 = vdwg.mxu0
    %1127 = vmatprep.subr.mxu0 0.0
    %v1128 = vand.u32 %v565, 4294901760
    %1129 = vmatpush1.msra.mxu0 %v1128
    %1130 = vmatprep.subr.mxu0 0.0
    %v1131 = vand.u32 %v564, 4294901760
    %1132 = vmatpush1.msra.mxu0 %v1131
    %1133 = vmatprep.subr.mxu0 0.0
    %v1134 = vand.u32 %v563, 4294901760
    %1135 = vmatpush1.msra.mxu0 %v1134
    %1136 = vmatprep.subr.mxu0 0.0
    %v1137 = vand.u32 %v562, 4294901760
    %1138 = vmatpush1.msra.mxu0 %v1137
    %1139 = vmatprep.subr.mxu0 0.0
    %v1140 = vand.u32 %v561, 4294901760
    %1141 = vmatpush1.msra.mxu0 %v1140
    %1142 = vmatprep.subr.mxu0 0.0
    %v1143 = vand.u32 %v560, 4294901760
    %1144 = vmatpush1.msra.mxu0 %v1143
    %1145 = vmatprep.subr.mxu0 0.0
    %v1146 = vand.u32 %v559, 4294901760
    %1147 = vmatpush1.msra.mxu0 %v1146
    %1148 = vmatprep.subr.mxu0 0.0
    %v1149 = vand.u32 %v558, 4294901760
    %1150 = vmatpush1.msra.mxu0 %v1149
    %1151 = vmatprep.subr.mxu0 0.0
    %v1152 = vand.u32 %v557, 4294901760
    %1153 = vmatpush1.msra.mxu0 %v1152
    %1154 = vmatprep.subr.mxu0 0.0
    %v1155 = vand.u32 %v556, 4294901760
    %1156 = vmatpush1.msra.mxu0 %v1155
    %1157 = vmatprep.subr.mxu0 0.0
    %v1158 = vand.u32 %v555, 4294901760
    %1159 = vmatpush1.msra.mxu0 %v1158
    %1160 = vmatprep.subr.mxu0 0.0
    %v1161 = vand.u32 %v554, 4294901760
    %1162 = vmatpush1.msra.mxu0 %v1161
    %1163 = vmatprep.subr.mxu0 0.0
    %v1164 = vand.u32 %v553, 4294901760
    %1165 = vmatpush1.msra.mxu0 %v1164
    %1166 = vmatprep.subr.mxu0 0.0
    %v1167 = vand.u32 %v552, 4294901760
    %1168 = vmatpush1.msra.mxu0 %v1167
    %1169 = vmatprep.subr.mxu0 0.0
    %v1170 = vand.u32 %v551, 4294901760
    %1171 = vmatpush1.msra.mxu0 %v1170
    %1172 = vmatprep.subr.mxu0 0.0
    %v1173 = vand.u32 %v550, 4294901760
    %1174 = vmatpush1.msra.mxu0 %v1173
    %1175 = vmatprep.subr.mxu0 0.0
    %1176 = vmatpush2.msra.mxu0 0.0
    %1177 = vmatprep.subr.mxu0 0.0
    %1178 = vmatpush2.msra.mxu0 0.0
    %1179 = vmatprep.subr.mxu0 0.0
    %1180 = vmatpush2.msra.mxu0 0.0
    %1181 = vmatprep.subr.mxu0 0.0
    %1182 = vmatpush2.msra.mxu0 0.0
    %1183 = vmatprep.subr.mxu0 0.0
    %1184 = vmatpush2.msra.mxu0 0.0
    %1185 = vmatprep.subr.mxu0 0.0
    %1186 = vmatpush2.msra.mxu0 0.0
    %1187 = vmatprep.subr.mxu0 0.0
    %1188 = vmatpush2.msra.mxu0 0.0
    %1189 = vmatprep.subr.mxu0 0.0
    %1190 = vmatpush2.msra.mxu0 0.0
    %1191 = vmatprep.subr.mxu0 0.0
    %1192 = vmatpush2.msra.mxu0 0.0
    %1193 = vmatprep.subr.mxu0 0.0
    %1194 = vmatpush2.msra.mxu0 0.0
    %1195 = vmatprep.subr.mxu0 0.0
    %1196 = vmatpush2.msra.mxu0 0.0
    %1197 = vmatprep.subr.mxu0 0.0
    %1198 = vmatpush2.msra.mxu0 0.0
    %1199 = vmatprep.subr.mxu0 0.0
    %1200 = vmatpush2.msra.mxu0 0.0
    %1201 = vmatprep.subr.mxu0 0.0
    %1202 = vmatpush2.msra.mxu0 0.0
    %1203 = vmatprep.subr.mxu0 0.0
    %1204 = vmatpush2.msra.mxu0 0.0
    %1205 = vmatprep.subr.mxu0 0.0
    %1206 = vmatpush2.msra.mxu0 0.0
    %1207 = vmatprep.mubr.f32.mxu0 0.0
    %v1208 = vand.u32 %v549, 4294901760
    %1209 = vmatmul.mubr.f32.gmra.mxu0 %v1208
    %v1210 = vpop.f32.mrf.mxu0
    %v1211 = vadd.f32 %v1124, %v1210
    %v1212 = vpop.f32.mrf.mxu0
    %1213 = vdwg.mxu0
    %1214 = vst [vmem:[%s5] sm:$0xff] %v1211
    // Predicated region
    $region30: #{attack_mlp_forward.1} parent=1 // pred_check
      _
    $region31: #{attack_mlp_forward.1} parent=1 // pred_check_branch
      %1216 = sbr.rel (0) target = $region33
    $region32: #{attack_mlp_forward.1} parent=1 // pred_region
      _
    $region33: #{attack_mlp_forward.1} parent=1 // pred_fallthru
      _
    // Predicated region
    $region34: #{attack_mlp_forward.1} parent=1 // pred_check
      _
    $region35: #{attack_mlp_forward.1} parent=1 // pred_check_branch
      %1218 = sbr.rel (0) target = $region37
    $region36: #{attack_mlp_forward.1} parent=1 // pred_region
      _
    $region37: #{attack_mlp_forward.1} parent=1 // pred_fallthru
      _
    %1219 = vsyncpa [#allocation3], 1
    %1220 = vsyncpa [#allocation5], 1

</llo_original>
